<compile_context>
chip_gen: v5e
topology: v5e:2x2
jax: 0.10.0
libtpu: 0.0.40
codegen_flags: <defaults>
</compile_context>

<pallas_src>
import jax
import jax.numpy as jnp
from jax.experimental import pallas as pl
from jax.experimental.pallas import tpu as pltpu

_LANES = 128  # lane-dense output width (q1 in lane 0, q2 in lane 1)


def _round_up(x, m):
    return ((x + m - 1) // m) * m


def _ew_dtype_for_backend():
    """bf16 elementwise only on chips with a bf16 VALU (v6e / v7x)."""
    try:
        kind = jax.devices()[0].device_kind.lower()
    except Exception:
        return jnp.float32
    return jnp.bfloat16 if ("v6" in kind or "v7" in kind) else jnp.float32


def _make_mlp3_kernel(ew_dtype):
    """3-layer MLP tile kernel: out = relu(relu(sa@w1+b1)@w2+b2)@w3 + b3.

    bf16 MXU operands, f32 accumulation; bias-add / ReLU in `ew_dtype`
    (bf16 on v6e/v7x, f32 on v5e); final bias-add and store stay f32.
    """
    def kernel(sa_ref, w1_ref, b1_ref, w2_ref, b2_ref, w3_ref, b3_ref, out_ref):
        h = jnp.dot(sa_ref[...], w1_ref[...], preferred_element_type=jnp.float32)
        h = jnp.maximum(h.astype(ew_dtype) + b1_ref[...], 0.0).astype(jnp.bfloat16)
        h = jnp.dot(h, w2_ref[...], preferred_element_type=jnp.float32)
        h = jnp.maximum(h.astype(ew_dtype) + b2_ref[...], 0.0).astype(jnp.bfloat16)
        q = jnp.dot(h, w3_ref[...], preferred_element_type=jnp.float32)
        out_ref[...] = (q + b3_ref[...].astype(jnp.float32)).astype(out_ref.dtype)
    return kernel


def _run_mlp3(sa_bf16, weights, biases, *, block_rows, ew_dtype):
    """Drive the tile kernel over the batch. Returns [B, 128] f32."""
    B, D = sa_bf16.shape

    # Tile choice: at most block_rows, but aim for >= 2 grid steps so v7x's
    # two TensorCores both get work (batch axis is "parallel"). 16-row
    # alignment keeps bf16 sublane packing happy.
    tb = max(16, min(int(block_rows), _round_up(pl.cdiv(B, 2), 16)))
    n_blocks = pl.cdiv(B, tb)
    Bp = n_blocks * tb
    if Bp != B:                                   # pad ragged batch tile
        sa_bf16 = jnp.pad(sa_bf16, ((0, Bp - B), (0, 0)))

    w1, w2, w3 = weights
    b1, b2, b3 = biases
    operands = (sa_bf16, w1, b1, w2, b2, w3, b3)

    # Weights/biases: constant index_map -> DMA'd once, VMEM-resident across
    # grid steps. sa / out tiles stream with automatic double-buffering.
    # TODO(synk): pipeline_mode=pl.Buffered(1) on the resident specs would drop
    # their unused second pipeline buffer; left at default for portability.
    def resident(x):
        return pl.BlockSpec(x.shape, lambda i: (0, 0))

    in_specs = [pl.BlockSpec((tb, D), lambda i: (i, 0))]
    in_specs += [resident(x) for x in operands[1:]]
    out_specs = pl.BlockSpec((tb, _LANES), lambda i: (i, 0))

    F1 = w1.shape[1]
    F2 = w2.shape[1]
    flops = 2 * Bp * (D * F1 + F1 * F2 + F2 * _LANES)
    bytes_accessed = (int(sa_bf16.size) * 2
                      + sum(int(x.size) * x.dtype.itemsize for x in operands[1:])
                      + Bp * _LANES * 4)

    out = pl.pallas_call(
        _make_mlp3_kernel(ew_dtype),
        out_shape=jax.ShapeDtypeStruct((Bp, _LANES), jnp.float32),
        grid=(n_blocks,),
        in_specs=in_specs,
        out_specs=out_specs,
        compiler_params=pltpu.CompilerParams(
            # batch axis is embarrassingly parallel -> megacore sharding on v7x
            dimension_semantics=("parallel",),
        ),
        cost_estimate=pl.CostEstimate(
            flops=flops, transcendentals=0, bytes_accessed=bytes_accessed),
    )(*operands)
    return out[:B]


def q_critic_forward(state, action, params, *, block_rows=1024, ew_dtype=None):
    """state: [B, S] f32, action: [B, A] f32.
    Returns (q1, q2), each [B, 1] f32 — matches Q_Critic.forward."""
    if ew_dtype is None:
        ew_dtype = _ew_dtype_for_backend()

    # bf16 sa in the wrapper: halves the streamed HBM read, no in-kernel cast.
    sa = jnp.concatenate([state, action], axis=1).astype(jnp.bfloat16)
    H = params["w1"].shape[1]

    # ---- fuse the twin heads into one 3-matmul network of width 2H ----
    w1f = jnp.concatenate([params["w1"], params["w4"]], axis=1)           # [D, 2H]
    b1f = jnp.concatenate([params["b1"], params["b4"]], axis=1)           # [1, 2H]
    w2f = jnp.zeros((2 * H, 2 * H), jnp.float32)
    w2f = w2f.at[:H, :H].set(params["w2"]).at[H:, H:].set(params["w5"])   # blockdiag
    b2f = jnp.concatenate([params["b2"], params["b5"]], axis=1)           # [1, 2H]
    w3f = jnp.zeros((2 * H, _LANES), jnp.float32)
    w3f = w3f.at[:H, 0:1].set(params["w3"]).at[H:, 1:2].set(params["w6"])  # q1->lane0, q2->lane1
    b3f = jnp.zeros((1, _LANES), jnp.float32)
    b3f = b3f.at[:, 0:1].set(params["b3"]).at[:, 1:2].set(params["b6"])

    weights = tuple(w.astype(jnp.bfloat16) for w in (w1f, w2f, w3f))
    biases = (b1f.astype(ew_dtype), b2f.astype(ew_dtype), b3f)  # final bias stays f32

    out = _run_mlp3(sa, weights, biases, block_rows=block_rows, ew_dtype=ew_dtype)
    return out[:, 0:1], out[:, 1:2]


def q_critic_Q1(state, action, params, *, block_rows=1024, ew_dtype=None):
    """Equivalent of Q_Critic.Q1 — single-head path, the second head is never
    computed (half the MXU work / weight DMA vs. forward)."""
    if ew_dtype is None:
        ew_dtype = _ew_dtype_for_backend()

    sa = jnp.concatenate([state, action], axis=1).astype(jnp.bfloat16)
    H = params["w1"].shape[1]

    w3p = jnp.zeros((H, _LANES), jnp.float32).at[:, 0:1].set(params["w3"])
    b3p = jnp.zeros((1, _LANES), jnp.float32).at[:, 0:1].set(params["b3"])
    weights = (params["w1"].astype(jnp.bfloat16),
               params["w2"].astype(jnp.bfloat16),
               w3p.astype(jnp.bfloat16))
    biases = (params["b1"].astype(ew_dtype), params["b2"].astype(ew_dtype), b3p)

    out = _run_mlp3(sa, weights, biases, block_rows=block_rows, ew_dtype=ew_dtype)
    return out[:, 0:1]


def init_q_critic_params(key, state_dim, action_dim, net_width):
    """Deterministic init mimicking nn.Linear's U(-1/sqrt(fan_in), 1/sqrt(fan_in)).
    Weights stored transposed: [in_features, out_features]."""
    keys = jax.random.split(key, 12)

    def lin(kw, kb, fan_in, fan_out):
        bound = 1.0 / jnp.sqrt(jnp.float32(fan_in))
        w = jax.random.uniform(kw, (fan_in, fan_out), jnp.float32, -bound, bound)
        b = jax.random.uniform(kb, (1, fan_out), jnp.float32, -bound, bound)
        return w, b

    D = state_dim + action_dim
    p = {}
    p["w1"], p["b1"] = lin(keys[0], keys[1], D, net_width)
    p["w2"], p["b2"] = lin(keys[2], keys[3], net_width, net_width)
    p["w3"], p["b3"] = lin(keys[4], keys[5], net_width, 1)
    p["w4"], p["b4"] = lin(keys[6], keys[7], D, net_width)
    p["w5"], p["b5"] = lin(keys[8], keys[9], net_width, net_width)
    p["w6"], p["b6"] = lin(keys[10], keys[11], net_width, 1)
    return p


def q_critic_reference(state, action, params):
    """Pure-JAX reference with the same bf16-operand / f32-accumulate matmuls."""
    def dot(a, b):
        return jnp.dot(a.astype(jnp.bfloat16), b.astype(jnp.bfloat16),
                       preferred_element_type=jnp.float32)

    sa = jnp.concatenate([state, action], axis=1)

    def head(w1, b1, w2, b2, w3, b3):
        h = jax.nn.relu(dot(sa, w1) + b1)
        h = jax.nn.relu(dot(h, w2) + b2)
        return dot(h, w3) + b3

    q1 = head(params["w1"], params["b1"], params["w2"], params["b2"],
              params["w3"], params["b3"])
    q2 = head(params["w4"], params["b4"], params["w5"], params["b5"],
              params["w6"], params["b6"])
    return q1, q2


if __name__ == "__main__":
    key = jax.random.PRNGKey(0)
    k_param, k_state, k_action = jax.random.split(key, 3)

    # Small but grid-exercising size: 2 grid steps of 256 rows each.
    batch = 512
    state_dim = 16
    action_dim = 8
    net_width = 64

    params = init_q_critic_params(k_param, state_dim, action_dim, net_width)
    state = jax.random.normal(k_state, (batch, state_dim), jnp.float32)
    action = jax.random.normal(k_action, (batch, action_dim), jnp.float32)

    q1, q2 = q_critic_forward(state, action, params)
    q1, q2 = jax.block_until_ready((q1, q2))
    q1_only = jax.block_until_ready(q_critic_Q1(state, action, params))

    r1, r2 = q_critic_reference(state, action, params)
    assert q1.shape == (batch, 1) and q2.shape == (batch, 1)
    assert q1_only.shape == (batch, 1)
    assert jnp.allclose(q1, r1, atol=3e-2, rtol=3e-2), "q1 mismatch vs reference"
    assert jnp.allclose(q2, r2, atol=3e-2, rtol=3e-2), "q2 mismatch vs reference"
    assert jnp.allclose(q1_only, r1, atol=3e-2, rtol=3e-2), "Q1 mismatch vs reference"

    print("KERNEL_OK")
</pallas_src>

<mosaic_0001>
module attributes {stable_mosaic.version = 11 : i64} {
  func.func @kernel(%arg0: i32, %arg1: memref<256x24xbf16, #tpu.memory_space<vmem>>, %arg2: memref<24x128xbf16, #tpu.memory_space<vmem>>, %arg3: memref<1x128xf32, #tpu.memory_space<vmem>>, %arg4: memref<128x128xbf16, #tpu.memory_space<vmem>>, %arg5: memref<1x128xf32, #tpu.memory_space<vmem>>, %arg6: memref<128x128xbf16, #tpu.memory_space<vmem>>, %arg7: memref<1x128xf32, #tpu.memory_space<vmem>>, %arg8: memref<256x128xf32, #tpu.memory_space<vmem>>) attributes {dimension_semantics = [#tpu.dimension_semantics<parallel>], iteration_bounds = array<i64: 2>, scalar_prefetch = 0 : i64, scratch_operands = 0 : i64, tpu.core_type = #tpu.core_type<tc>, window_params = [{transform_indices = @transform_0, window_bounds = array<i64: 256, 24>}, {pipeline_mode = #tpu.pipeline_mode<synchronous>, transform_indices = @transform_1, window_bounds = array<i64: 24, 128>}, {pipeline_mode = #tpu.pipeline_mode<synchronous>, transform_indices = @transform_2, window_bounds = array<i64: 1, 128>}, {pipeline_mode = #tpu.pipeline_mode<synchronous>, transform_indices = @transform_3, window_bounds = array<i64: 128, 128>}, {pipeline_mode = #tpu.pipeline_mode<synchronous>, transform_indices = @transform_4, window_bounds = array<i64: 1, 128>}, {pipeline_mode = #tpu.pipeline_mode<synchronous>, transform_indices = @transform_5, window_bounds = array<i64: 128, 128>}, {pipeline_mode = #tpu.pipeline_mode<synchronous>, transform_indices = @transform_6, window_bounds = array<i64: 1, 128>}, {transform_indices = @transform_7, window_bounds = array<i64: 256, 128>}]} {
    %c0 = arith.constant 0 : index
    %c0_0 = arith.constant 0 : index
    %0 = vector.load %arg1[%c0, %c0_0] : memref<256x24xbf16, #tpu.memory_space<vmem>>, vector<256x24xbf16>
    %c0_1 = arith.constant 0 : index
    %c0_2 = arith.constant 0 : index
    %1 = vector.load %arg2[%c0_1, %c0_2] : memref<24x128xbf16, #tpu.memory_space<vmem>>, vector<24x128xbf16>
    %cst = arith.constant dense<0.000000e+00> : vector<256x128xf32>
    %2 = tpu.matmul %0, %1, %cst {dimension_numbers = #tpu.dot_dimension_numbers<[1], [0], [0], [1], [0, 0, 1, 1], [], []>} : vector<256x24xbf16>, vector<24x128xbf16>, vector<256x128xf32> -> vector<256x128xf32>
    %c0_3 = arith.constant 0 : index
    %c0_4 = arith.constant 0 : index
    %3 = vector.load %arg3[%c0_3, %c0_4] : memref<1x128xf32, #tpu.memory_space<vmem>>, vector<1x128xf32>
    %4 = vector.broadcast %3 : vector<1x128xf32> to vector<256x128xf32>
    %5 = arith.addf %2, %4 : vector<256x128xf32>
    %cst_5 = arith.constant 0.000000e+00 : f32
    %6 = vector.broadcast %cst_5 : f32 to vector<256x128xf32>
    %7 = arith.maximumf %5, %6 : vector<256x128xf32>
    %8 = arith.truncf %7 : vector<256x128xf32> to vector<256x128xbf16>
    %c0_6 = arith.constant 0 : index
    %c0_7 = arith.constant 0 : index
    %9 = vector.load %arg4[%c0_6, %c0_7] : memref<128x128xbf16, #tpu.memory_space<vmem>>, vector<128x128xbf16>
    %cst_8 = arith.constant dense<0.000000e+00> : vector<256x128xf32>
    %10 = tpu.matmul %8, %9, %cst_8 {dimension_numbers = #tpu.dot_dimension_numbers<[1], [0], [0], [1], [0, 0, 1, 1], [], []>} : vector<256x128xbf16>, vector<128x128xbf16>, vector<256x128xf32> -> vector<256x128xf32>
    %c0_9 = arith.constant 0 : index
    %c0_10 = arith.constant 0 : index
    %11 = vector.load %arg5[%c0_9, %c0_10] : memref<1x128xf32, #tpu.memory_space<vmem>>, vector<1x128xf32>
    %12 = vector.broadcast %11 : vector<1x128xf32> to vector<256x128xf32>
    %13 = arith.addf %10, %12 : vector<256x128xf32>
    %cst_11 = arith.constant 0.000000e+00 : f32
    %14 = vector.broadcast %cst_11 : f32 to vector<256x128xf32>
    %15 = arith.maximumf %13, %14 : vector<256x128xf32>
    %16 = arith.truncf %15 : vector<256x128xf32> to vector<256x128xbf16>
    %c0_12 = arith.constant 0 : index
    %c0_13 = arith.constant 0 : index
    %17 = vector.load %arg6[%c0_12, %c0_13] : memref<128x128xbf16, #tpu.memory_space<vmem>>, vector<128x128xbf16>
    %cst_14 = arith.constant dense<0.000000e+00> : vector<256x128xf32>
    %18 = tpu.matmul %16, %17, %cst_14 {dimension_numbers = #tpu.dot_dimension_numbers<[1], [0], [0], [1], [0, 0, 1, 1], [], []>} : vector<256x128xbf16>, vector<128x128xbf16>, vector<256x128xf32> -> vector<256x128xf32>
    %c0_15 = arith.constant 0 : index
    %c0_16 = arith.constant 0 : index
    %19 = vector.load %arg7[%c0_15, %c0_16] : memref<1x128xf32, #tpu.memory_space<vmem>>, vector<1x128xf32>
    %20 = vector.broadcast %19 : vector<1x128xf32> to vector<256x128xf32>
    %21 = arith.addf %18, %20 : vector<256x128xf32>
    %c0_17 = arith.constant 0 : index
    %c0_18 = arith.constant 0 : index
    %22 = vector.load %arg8[%c0_17, %c0_18] : memref<256x128xf32, #tpu.memory_space<vmem>>, vector<256x128xf32>
    tpu.vector_store %arg8[%c0_17, %c0_18], %21 {strides = array<i32>} : memref<256x128xf32, #tpu.memory_space<vmem>>, vector<256x128xf32>,
    return
  }
  func.func @transform_0(%arg0: i32) -> (i32, i32) {
    %c0_i32 = arith.constant 0 : i32
    %c0_i32_0 = arith.constant 0 : i32
    return %arg0, %c0_i32 : i32, i32
  }
  func.func @transform_1(%arg0: i32) -> (i32, i32) {
    %c0_i32 = arith.constant 0 : i32
    %c0_i32_0 = arith.constant 0 : i32
    %c0_i32_1 = arith.constant 0 : i32
    return %c0_i32, %c0_i32_0 : i32, i32
  }
  func.func @transform_2(%arg0: i32) -> (i32, i32) {
    %c0_i32 = arith.constant 0 : i32
    %c0_i32_0 = arith.constant 0 : i32
    %c0_i32_1 = arith.constant 0 : i32
    return %c0_i32, %c0_i32_0 : i32, i32
  }
  func.func @transform_3(%arg0: i32) -> (i32, i32) {
    %c0_i32 = arith.constant 0 : i32
    %c0_i32_0 = arith.constant 0 : i32
    %c0_i32_1 = arith.constant 0 : i32
    return %c0_i32, %c0_i32_0 : i32, i32
  }
  func.func @transform_4(%arg0: i32) -> (i32, i32) {
    %c0_i32 = arith.constant 0 : i32
    %c0_i32_0 = arith.constant 0 : i32
    %c0_i32_1 = arith.constant 0 : i32
    return %c0_i32, %c0_i32_0 : i32, i32
  }
  func.func @transform_5(%arg0: i32) -> (i32, i32) {
    %c0_i32 = arith.constant 0 : i32
    %c0_i32_0 = arith.constant 0 : i32
    %c0_i32_1 = arith.constant 0 : i32
    return %c0_i32, %c0_i32_0 : i32, i32
  }
  func.func @transform_6(%arg0: i32) -> (i32, i32) {
    %c0_i32 = arith.constant 0 : i32
    %c0_i32_0 = arith.constant 0 : i32
    %c0_i32_1 = arith.constant 0 : i32
    return %c0_i32, %c0_i32_0 : i32, i32
  }
  func.func @transform_7(%arg0: i32) -> (i32, i32) {
    %c0_i32 = arith.constant 0 : i32
    %c0_i32_0 = arith.constant 0 : i32
    return %arg0, %c0_i32 : i32, i32
  }
}

</mosaic_0001>

<llo_original>
// kernel: tpu_custom_call.1
$region0: #{tpu_custom_call.1}
  #allocation0 [shape = 'u32[]', space=smem, size = 0x4, offset = 0x4, fixed_abs, tag = 'smem constant byte address 0x4 - core index']
  #allocation1 [shape = 'u32[72,128]{1,0:T(1,128)}', space=vmem, size = 0x9000, scoped, tag = 'internal scratch']
  %s0 = inlined_call_operand.vmem [shape: bf16[512,24], index: 0, kind: input, shape index: {}]
  %s1 = inlined_call_operand.vmem [shape: bf16[24,128], index: 1, kind: input, shape index: {}]
  %s2 = inlined_call_operand.vmem [shape: f32[1,128], index: 2, kind: input, shape index: {}]
  %s3 = inlined_call_operand.vmem [shape: bf16[128,128], index: 3, kind: input, shape index: {}]
  %s4 = inlined_call_operand.vmem [shape: f32[1,128], index: 4, kind: input, shape index: {}]
  %s5 = inlined_call_operand.vmem [shape: bf16[128,128], index: 5, kind: input, shape index: {}]
  %s6 = inlined_call_operand.vmem [shape: f32[1,128], index: 6, kind: input, shape index: {}]
  %s7 = inlined_call_operand.hbm [shape: f32[512,128], index: 7, kind: output, shape index: {}]
  %s8 = sld [smem:[#allocation0]]
  $region61: #{tpu_custom_call.1} parent=0
    _
  %s10 = ssub.s32 1, %s8
  %s11 = scalar_select 0, %s10, %s8
  $region1: #{tpu_custom_call.1} parent=0
    #allocation2 [shape = 'u8[262144]{0}', space=vmem, size = 0x40000, scoped, tag = 'output window, operand 0']
    #allocation3 [shape = 's32[2]{0}', space=sflag, size = 0x8, scoped, tag = 'scoped memory for tpu_custom_call.1']
    %12 = vsyncpa [#allocation3], 0
    %s13 = scalar_lea.sflag [#allocation3], 1
    %14 = vsyncpa %s13, 0
    loop: start=0, step=1, limit=4
    $region2: #{tpu_custom_call.1} parent=1 // loop_pre_header
      _
    $region3: #{tpu_custom_call.1} parent=1 // loop_header
      %s16 = sphi 0, %s20
      %p17 = scmp.ge.s32.totalorder %s16, 4
      %s26 = sphi 0, %s28
      %s29 = sphi 0, %s26
      %s30 = sphi 0, %s29
      %s46 = sphi 0, %s30
      %s50 = sphi 0, %s50
      %s52 = sphi 0, %s50
      %s53 = sphi 0, %s52
      %s67 = sphi 0, %s53
      %s71 = sphi 0, %s71
      %s73 = sphi 0, %s71
      %s74 = sphi 0, %s73
      %s88 = sphi 0, %s74
      %s92 = sphi 0, %s92
      %s94 = sphi 0, %s92
      %s95 = sphi 0, %s94
      %s109 = sphi 0, %s95
      %s113 = sphi 0, %s113
      %s115 = sphi 0, %s113
      %s116 = sphi 0, %s115
      %s130 = sphi 0, %s116
      %s134 = sphi 0, %s134
      %s136 = sphi 0, %s134
      %s137 = sphi 0, %s136
      %s151 = sphi 0, %s137
      %s155 = sphi 0, %s155
      %s157 = sphi 0, %s155
      %s158 = sphi 0, %s157
      %s172 = sphi 0, %s158
      %s178 = sphi 0, %s180
      %s181 = sphi 0, %s178
      %s182 = sphi 0, %s181
      %s198 = sphi 0, %s182
    $region4: #{tpu_custom_call.1} parent=1 // loop_header_branch
      %19 = sbr.rel (%p17) target = $region8
    $region5: #{tpu_custom_call.1} parent=1 // loop_body
      %s21 = ssub.s32 %s16, 1
      %s22 = ssub.s32 %s16, 2
      %s23 = sadd.s32 %s16, 1
      %s24 = ssub.s32 %s16, %s23
      %p25 = scmp.eq.s32.totalorder %s24, 0
      %s27 = sadd.s32 %s26, 1
      %s28 = scalar_select %p25, %s26, %s27
      %p31 = pneg %p25
      %p32 = scmp.eq.s32.totalorder %s16, 1
      %p33 = por %p31, %p32
      %p34 = scmp.ne.s32.totalorder %s26, %s29
      %p35 = scmp.eq.s32.totalorder %s16, 0
      %p36 = por %p34, %p35
      %p37 = scmp.ne.s32.totalorder %s26, %s29
      %p38 = scmp.eq.s32.totalorder %s21, 1
      %p39 = por %p37, %p38
      %p40 = scmp.ne.s32.totalorder %s29, %s30
      %p41 = scmp.eq.s32.totalorder %s21, 0
      %p42 = por %p40, %p41
      %p43 = scmp.ne.s32.totalorder %s29, %s30
      %p44 = scmp.eq.s32.totalorder %s22, 1
      %p45 = por %p43, %p44
      %p47 = scmp.ne.s32.totalorder %s30, %s46
      %p48 = scmp.eq.s32.totalorder %s22, 0
      %p49 = por %p47, %p48
      %s51 = sadd.s32 %s50, 1
      %p54 = scmp.eq.s32.totalorder %s16, 1
      %p55 = scmp.ne.s32.totalorder %s50, %s52
      %p56 = scmp.eq.s32.totalorder %s16, 0
      %p57 = por %p55, %p56
      %p58 = scmp.ne.s32.totalorder %s50, %s52
      %p59 = scmp.eq.s32.totalorder %s21, 1
      %p60 = por %p58, %p59
      %p61 = scmp.ne.s32.totalorder %s52, %s53
      %p62 = scmp.eq.s32.totalorder %s21, 0
      %p63 = por %p61, %p62
      %p64 = scmp.ne.s32.totalorder %s52, %s53
      %p65 = scmp.eq.s32.totalorder %s22, 1
      %p66 = por %p64, %p65
      %p68 = scmp.ne.s32.totalorder %s53, %s67
      %p69 = scmp.eq.s32.totalorder %s22, 0
      %p70 = por %p68, %p69
      %s72 = sadd.s32 %s71, 1
      %p75 = scmp.eq.s32.totalorder %s16, 1
      %p76 = scmp.ne.s32.totalorder %s71, %s73
      %p77 = scmp.eq.s32.totalorder %s16, 0
      %p78 = por %p76, %p77
      %p79 = scmp.ne.s32.totalorder %s71, %s73
      %p80 = scmp.eq.s32.totalorder %s21, 1
      %p81 = por %p79, %p80
      %p82 = scmp.ne.s32.totalorder %s73, %s74
      %p83 = scmp.eq.s32.totalorder %s21, 0
      %p84 = por %p82, %p83
      %p85 = scmp.ne.s32.totalorder %s73, %s74
      %p86 = scmp.eq.s32.totalorder %s22, 1
      %p87 = por %p85, %p86
      %p89 = scmp.ne.s32.totalorder %s74, %s88
      %p90 = scmp.eq.s32.totalorder %s22, 0
      %p91 = por %p89, %p90
      %s93 = sadd.s32 %s92, 1
      %p96 = scmp.eq.s32.totalorder %s16, 1
      %p97 = scmp.ne.s32.totalorder %s92, %s94
      %p98 = scmp.eq.s32.totalorder %s16, 0
      %p99 = por %p97, %p98
      %p100 = scmp.ne.s32.totalorder %s92, %s94
      %p101 = scmp.eq.s32.totalorder %s21, 1
      %p102 = por %p100, %p101
      %p103 = scmp.ne.s32.totalorder %s94, %s95
      %p104 = scmp.eq.s32.totalorder %s21, 0
      %p105 = por %p103, %p104
      %p106 = scmp.ne.s32.totalorder %s94, %s95
      %p107 = scmp.eq.s32.totalorder %s22, 1
      %p108 = por %p106, %p107
      %p110 = scmp.ne.s32.totalorder %s95, %s109
      %p111 = scmp.eq.s32.totalorder %s22, 0
      %p112 = por %p110, %p111
      %s114 = sadd.s32 %s113, 1
      %p117 = scmp.eq.s32.totalorder %s16, 1
      %p118 = scmp.ne.s32.totalorder %s113, %s115
      %p119 = scmp.eq.s32.totalorder %s16, 0
      %p120 = por %p118, %p119
      %p121 = scmp.ne.s32.totalorder %s113, %s115
      %p122 = scmp.eq.s32.totalorder %s21, 1
      %p123 = por %p121, %p122
      %p124 = scmp.ne.s32.totalorder %s115, %s116
      %p125 = scmp.eq.s32.totalorder %s21, 0
      %p126 = por %p124, %p125
      %p127 = scmp.ne.s32.totalorder %s115, %s116
      %p128 = scmp.eq.s32.totalorder %s22, 1
      %p129 = por %p127, %p128
      %p131 = scmp.ne.s32.totalorder %s116, %s130
      %p132 = scmp.eq.s32.totalorder %s22, 0
      %p133 = por %p131, %p132
      %s135 = sadd.s32 %s134, 1
      %p138 = scmp.eq.s32.totalorder %s16, 1
      %p139 = scmp.ne.s32.totalorder %s134, %s136
      %p140 = scmp.eq.s32.totalorder %s16, 0
      %p141 = por %p139, %p140
      %p142 = scmp.ne.s32.totalorder %s134, %s136
      %p143 = scmp.eq.s32.totalorder %s21, 1
      %p144 = por %p142, %p143
      %p145 = scmp.ne.s32.totalorder %s136, %s137
      %p146 = scmp.eq.s32.totalorder %s21, 0
      %p147 = por %p145, %p146
      %p148 = scmp.ne.s32.totalorder %s136, %s137
      %p149 = scmp.eq.s32.totalorder %s22, 1
      %p150 = por %p148, %p149
      %p152 = scmp.ne.s32.totalorder %s137, %s151
      %p153 = scmp.eq.s32.totalorder %s22, 0
      %p154 = por %p152, %p153
      %s156 = sadd.s32 %s155, 1
      %p159 = scmp.eq.s32.totalorder %s16, 1
      %p160 = scmp.ne.s32.totalorder %s155, %s157
      %p161 = scmp.eq.s32.totalorder %s16, 0
      %p162 = por %p160, %p161
      %p163 = scmp.ne.s32.totalorder %s155, %s157
      %p164 = scmp.eq.s32.totalorder %s21, 1
      %p165 = por %p163, %p164
      %p166 = scmp.ne.s32.totalorder %s157, %s158
      %p167 = scmp.eq.s32.totalorder %s21, 0
      %p168 = por %p166, %p167
      %p169 = scmp.ne.s32.totalorder %s157, %s158
      %p170 = scmp.eq.s32.totalorder %s22, 1
      %p171 = por %p169, %p170
      %p173 = scmp.ne.s32.totalorder %s158, %s172
      %p174 = scmp.eq.s32.totalorder %s22, 0
      %p175 = por %p173, %p174
      %s176 = ssub.s32 %s16, %s23
      %p177 = scmp.eq.s32.totalorder %s176, 0
      %s179 = sadd.s32 %s178, 1
      %s180 = scalar_select %p177, %s178, %s179
      %p183 = pneg %p177
      %p184 = scmp.eq.s32.totalorder %s16, 1
      %p185 = por %p183, %p184
      %p186 = scmp.ne.s32.totalorder %s178, %s181
      %p187 = scmp.eq.s32.totalorder %s16, 0
      %p188 = por %p186, %p187
      %p189 = scmp.ne.s32.totalorder %s178, %s181
      %p190 = scmp.eq.s32.totalorder %s21, 1
      %p191 = por %p189, %p190
      %p192 = scmp.ne.s32.totalorder %s181, %s182
      %p193 = scmp.eq.s32.totalorder %s21, 0
      %p194 = por %p192, %p193
      %p195 = scmp.ne.s32.totalorder %s181, %s182
      %p196 = scmp.eq.s32.totalorder %s22, 1
      %p197 = por %p195, %p196
      %p199 = scmp.ne.s32.totalorder %s182, %s198
      %p200 = scmp.eq.s32.totalorder %s22, 0
      %p201 = por %p199, %p200
      %p202 = scmp.le.s32.totalorder 1, %s16
      %p203 = scmp.lt.s32.totalorder %s16, 3
      %p204 = pnand %p202, %p203
      %p205 = pneg %p204
      // Predicated region
      $region9: #{tpu_custom_call.1} parent=5 // pred_check
        _
      $region10: #{tpu_custom_call.1} parent=5 // pred_check_branch
        %207 = sbr.rel (%p204) target = $region12
      $region11: #{tpu_custom_call.1} parent=5 // pred_region
        %s208 = ssub.s32 %s16, 1
        // Predicated region
        $region13: #{tpu_custom_call.1} parent=11 // pred_check
          %p209 = pneg %p63
        $region14: #{tpu_custom_call.1} parent=11 // pred_check_branch
          %211 = sbr.rel (%p209) target = $region16
        $region15: #{tpu_custom_call.1} parent=11 // pred_region
          _
        $region16: #{tpu_custom_call.1} parent=11 // pred_fallthru
          _
        // Predicated region
        $region17: #{tpu_custom_call.1} parent=11 // pred_check
          %p212 = pneg %p84
        $region18: #{tpu_custom_call.1} parent=11 // pred_check_branch
          %214 = sbr.rel (%p212) target = $region20
        $region19: #{tpu_custom_call.1} parent=11 // pred_region
          _
        $region20: #{tpu_custom_call.1} parent=11 // pred_fallthru
          _
        // Predicated region
        $region21: #{tpu_custom_call.1} parent=11 // pred_check
          %p215 = pneg %p105
        $region22: #{tpu_custom_call.1} parent=11 // pred_check_branch
          %217 = sbr.rel (%p215) target = $region24
        $region23: #{tpu_custom_call.1} parent=11 // pred_region
          _
        $region24: #{tpu_custom_call.1} parent=11 // pred_fallthru
          _
        // Predicated region
        $region25: #{tpu_custom_call.1} parent=11 // pred_check
          %p218 = pneg %p126
        $region26: #{tpu_custom_call.1} parent=11 // pred_check_branch
          %220 = sbr.rel (%p218) target = $region28
        $region27: #{tpu_custom_call.1} parent=11 // pred_region
          _
        $region28: #{tpu_custom_call.1} parent=11 // pred_fallthru
          _
        // Predicated region
        $region29: #{tpu_custom_call.1} parent=11 // pred_check
          %p221 = pneg %p147
        $region30: #{tpu_custom_call.1} parent=11 // pred_check_branch
          %223 = sbr.rel (%p221) target = $region32
        $region31: #{tpu_custom_call.1} parent=11 // pred_region
          _
        $region32: #{tpu_custom_call.1} parent=11 // pred_fallthru
          _
        // Predicated region
        $region33: #{tpu_custom_call.1} parent=11 // pred_check
          %p224 = pneg %p168
        $region34: #{tpu_custom_call.1} parent=11 // pred_check_branch
          %226 = sbr.rel (%p224) target = $region36
        $region35: #{tpu_custom_call.1} parent=11 // pred_region
          _
        $region36: #{tpu_custom_call.1} parent=11 // pred_fallthru
          _
      $region12: #{tpu_custom_call.1} parent=5 // pred_fallthru
        _
      %p227 = scmp.lt.s32.totalorder %s16, 2
      // Predicated region
      $region37: #{tpu_custom_call.1} parent=5 // pred_check
        %p228 = pneg %p227
      $region38: #{tpu_custom_call.1} parent=5 // pred_check_branch
        %230 = sbr.rel (%p228) target = $region40
      $region39: #{tpu_custom_call.1} parent=5 // pred_region
        // Predicated region
        $region41: #{tpu_custom_call.1} parent=39 // pred_check
          %p231 = pneg %p36
        $region42: #{tpu_custom_call.1} parent=39 // pred_check_branch
          %233 = sbr.rel (%p231) target = $region44
        $region43: #{tpu_custom_call.1} parent=39 // pred_region
          %s234 = smul.u32 32, %s16
          %p235 = scmp.lt.s32.totalorder %s234, 63
          %s236 = scalar_select %p235, %s234, 63
          %s237 = smul.addr %s236, 4
          %s238 = scalar_lea.vmem %s0, %s237
          %s239 = smul.u32 32, %s16
        $region44: #{tpu_custom_call.1} parent=39 // pred_fallthru
          _
      $region40: #{tpu_custom_call.1} parent=5 // pred_fallthru
        _
      %p240 = scmp.le.s32.totalorder 1, %s16
      %p241 = scmp.lt.s32.totalorder %s16, 3
      %p242 = pnand %p240, %p241
      %p243 = pneg %p242
      // Predicated region
      $region45: #{tpu_custom_call.1} parent=5 // pred_check
        _
      $region46: #{tpu_custom_call.1} parent=5 // pred_check_branch
        %245 = sbr.rel (%p242) target = $region48
      $region47: #{tpu_custom_call.1} parent=5 // pred_region
        %s246 = ssub.s32 %s16, 1
        %s247 = smul.u32 32, %s21
        %p248 = scmp.lt.s32.totalorder %s247, 63
        %s249 = scalar_select %p248, %s247, 63
        %s250 = smul.addr %s249, 4
        %s251 = scalar_lea.vmem %s0, %s250
        %p252 = pneg %p42
        %p253 = pneg %p39
        %p254 = pneg %p63
        %p255 = pneg %p60
        %p256 = pneg %p84
        %p257 = pneg %p81
        %p258 = pneg %p105
        %p259 = pneg %p102
        %p260 = pneg %p126
        %p261 = pneg %p123
        %p262 = pneg %p147
        %p263 = pneg %p144
        %p264 = pneg %p168
        %p265 = pneg %p165
        %p266 = pneg %p194
        %p267 = pneg %p191
        %s268 = sand.u32 %s181, 1
        %s269 = scalar_lea.sflag [#allocation3], %s268
        %s270 = sand.u32 %s181, 1
        %s271 = smul.addr %s270, 256
        %s272 = scalar_lea.vmem [#allocation2], %s271
        %s273 = smul.u32 32, %s21
        %p274 = scmp.lt.s32.totalorder %s273, 63
        %s275 = scalar_select %p274, %s273, 63
        %s276 = smul.addr %s275, 4
        %s277 = scalar_lea.vmem %s0, %s276
        %s278 = smul.u32 32, %s21
        %s279 = smul.u32 32, %s21
        %v281 = vld [vmem:[%s277] sm:$0xf]
        %v282 = vld [vmem:[%s277 + $0x4] sm:$0xf]
        %v283 = vld [vmem:[%s277 + $0x8] sm:$0xf]
        %v284 = vld [vmem:[%s277 + $0xc] sm:$0xf]
        %v285 = vld [vmem:[%s277 + $0x10] sm:$0xf]
        %v286 = vld [vmem:[%s277 + $0x14] sm:$0xf]
        %v287 = vld [vmem:[%s277 + $0x18] sm:$0xf]
        %v288 = vld [vmem:[%s277 + $0x1c] sm:$0xf]
        %v289 = vld [vmem:[%s277 + $0x20] sm:$0xf]
        %v290 = vld [vmem:[%s277 + $0x24] sm:$0xf]
        %v291 = vld [vmem:[%s277 + $0x28] sm:$0xf]
        %v292 = vld [vmem:[%s277 + $0x2c] sm:$0xf]
        %v293 = vld [vmem:[%s277 + $0x30] sm:$0xf]
        %v294 = vld [vmem:[%s277 + $0x34] sm:$0xf]
        %v295 = vld [vmem:[%s277 + $0x38] sm:$0xf]
        %v296 = vld [vmem:[%s277 + $0x3c] sm:$0xf]
        %v297 = vld [vmem:[%s277 + $0x40] sm:$0xf]
        %v298 = vld [vmem:[%s277 + $0x44] sm:$0xf]
        %v299 = vld [vmem:[%s277 + $0x48] sm:$0xf]
        %v300 = vld [vmem:[%s277 + $0x4c] sm:$0xf]
        %v301 = vld [vmem:[%s277 + $0x50] sm:$0xf]
        %v302 = vld [vmem:[%s277 + $0x54] sm:$0xf]
        %v303 = vld [vmem:[%s277 + $0x58] sm:$0xf]
        %v304 = vld [vmem:[%s277 + $0x5c] sm:$0xf]
        %v305 = vld [vmem:[%s277 + $0x60] sm:$0xf]
        %v306 = vld [vmem:[%s277 + $0x64] sm:$0xf]
        %v307 = vld [vmem:[%s277 + $0x68] sm:$0xf]
        %v308 = vld [vmem:[%s277 + $0x6c] sm:$0xf]
        %v309 = vld [vmem:[%s277 + $0x70] sm:$0xf]
        %v310 = vld [vmem:[%s277 + $0x74] sm:$0xf]
        %v311 = vld [vmem:[%s277 + $0x78] sm:$0xf]
        %v312 = vld [vmem:[%s277 + $0x7c] sm:$0xf]
        %v313 = vld [vmem:[%s1] sm:$0xf]
        %v314 = vld [vmem:[%s1 + $0x4] sm:$0xf]
        %v315 = vld [vmem:[%s1 + $0x8] sm:$0xf]
        %v316 = vld [vmem:[%s2] sm:$0x1]
        %v318 = vperm.slane %v316, 0
        %v352 = vunpack.c.l.b16 %v281
        %v353 = vunpack.c.l.b16 %v282
        %v354 = vunpack.c.l.b16 %v283
        %v355 = vunpack.c.l.b16 %v284
        %v356 = vunpack.c.l.b16 %v285
        %v357 = vunpack.c.l.b16 %v286
        %v358 = vunpack.c.l.b16 %v287
        %v359 = vunpack.c.l.b16 %v288
        %v360 = vunpack.c.l.b16 %v289
        %v361 = vunpack.c.l.b16 %v290
        %v362 = vunpack.c.l.b16 %v291
        %v363 = vunpack.c.l.b16 %v292
        %v364 = vunpack.c.l.b16 %v293
        %v365 = vunpack.c.l.b16 %v294
        %v366 = vunpack.c.l.b16 %v295
        %v367 = vunpack.c.l.b16 %v296
        %v368 = vunpack.c.l.b16 %v297
        %v369 = vunpack.c.l.b16 %v298
        %v370 = vunpack.c.l.b16 %v299
        %v371 = vunpack.c.l.b16 %v300
        %v372 = vunpack.c.l.b16 %v301
        %v373 = vunpack.c.l.b16 %v302
        %v374 = vunpack.c.l.b16 %v303
        %v375 = vunpack.c.l.b16 %v304
        %v376 = vunpack.c.l.b16 %v305
        %v377 = vunpack.c.l.b16 %v306
        %v378 = vunpack.c.l.b16 %v307
        %v379 = vunpack.c.l.b16 %v308
        %v380 = vunpack.c.l.b16 %v309
        %v381 = vunpack.c.l.b16 %v310
        %v382 = vunpack.c.l.b16 %v311
        %v383 = vunpack.c.l.b16 %v312
        %v384 = vpack.c.b16 %v353, %v352
        %v385 = vpack.c.b16 %v355, %v354
        %v386 = vpack.c.b16 %v357, %v356
        %v387 = vpack.c.b16 %v359, %v358
        %v388 = vpack.c.b16 %v361, %v360
        %v389 = vpack.c.b16 %v363, %v362
        %v390 = vpack.c.b16 %v365, %v364
        %v391 = vpack.c.b16 %v367, %v366
        %v392 = vpack.c.b16 %v369, %v368
        %v393 = vpack.c.b16 %v371, %v370
        %v394 = vpack.c.b16 %v373, %v372
        %v395 = vpack.c.b16 %v375, %v374
        %v396 = vpack.c.b16 %v377, %v376
        %v397 = vpack.c.b16 %v379, %v378
        %v398 = vpack.c.b16 %v381, %v380
        %v399 = vpack.c.b16 %v383, %v382
        %v403 = vunpack.c.l.b16 %v313
        %v404 = vunpack.c.l.b16 %v314
        %v405 = vunpack.c.l.b16 %v315
        %v406 = vpack.c.b16 %v404, %v403
        %v407 = vpack.c.b16 %v405, %v405
        %vm409 = vcmask 195584
        %v411 = vsel %vm409, %v384, 0
        %v414 = vsel %vm409, %v385, 0
        %v417 = vsel %vm409, %v386, 0
        %v420 = vsel %vm409, %v387, 0
        %v423 = vsel %vm409, %v388, 0
        %v426 = vsel %vm409, %v389, 0
        %v429 = vsel %vm409, %v390, 0
        %v432 = vsel %vm409, %v391, 0
        %v435 = vsel %vm409, %v392, 0
        %v438 = vsel %vm409, %v393, 0
        %v441 = vsel %vm409, %v394, 0
        %v444 = vsel %vm409, %v395, 0
        %v447 = vsel %vm409, %v396, 0
        %v450 = vsel %vm409, %v397, 0
        %v453 = vsel %vm409, %v398, 0
        %v456 = vsel %vm409, %v399, 0
        %vm458 = vcmask 1043456
        %v460 = vsel %vm458, %v407, 0
        %462 = vmatpush.bf16.msra.mxu0 0
        %463 = vmatpush.bf16.msra.mxu0 0
        %464 = vmatpush.bf16.msra.mxu0 0
        %465 = vmatpush.bf16.msra.mxu0 0
        %466 = vmatpush.bf16.msra.mxu0 0
        %467 = vmatpush.bf16.msra.mxu0 0
        %468 = vmatpush.bf16.msra.mxu0 %v460
        %469 = vmatpush.bf16.msra.mxu0 %v406
        %470 = vmatmul.bf16.gmra.mxu0 %v411
        %v471 = vpop.f32.mrf.mxu0
        %v472 = vadd.f32 %v318, %v471
        %v473 = vpop.f32.mrf.mxu0
        %v474 = vadd.f32 %v318, %v473
        %475 = vmatmul.bf16.gmra.mxu0 %v414
        %v476 = vpop.f32.mrf.mxu0
        %v477 = vadd.f32 %v318, %v476
        %v478 = vpop.f32.mrf.mxu0
        %v479 = vadd.f32 %v318, %v478
        %480 = vmatmul.bf16.gmra.mxu0 %v417
        %v481 = vpop.f32.mrf.mxu0
        %v482 = vadd.f32 %v318, %v481
        %v483 = vpop.f32.mrf.mxu0
        %v484 = vadd.f32 %v318, %v483
        %485 = vmatmul.bf16.gmra.mxu0 %v420
        %v486 = vpop.f32.mrf.mxu0
        %v487 = vadd.f32 %v318, %v486
        %v488 = vpop.f32.mrf.mxu0
        %v489 = vadd.f32 %v318, %v488
        %490 = vmatmul.bf16.gmra.mxu0 %v423
        %v491 = vpop.f32.mrf.mxu0
        %v492 = vadd.f32 %v318, %v491
        %v493 = vpop.f32.mrf.mxu0
        %v494 = vadd.f32 %v318, %v493
        %495 = vmatmul.bf16.gmra.mxu0 %v426
        %v496 = vpop.f32.mrf.mxu0
        %v497 = vadd.f32 %v318, %v496
        %v498 = vpop.f32.mrf.mxu0
        %v499 = vadd.f32 %v318, %v498
        %500 = vmatmul.bf16.gmra.mxu0 %v429
        %v501 = vpop.f32.mrf.mxu0
        %v502 = vadd.f32 %v318, %v501
        %v503 = vpop.f32.mrf.mxu0
        %v504 = vadd.f32 %v318, %v503
        %505 = vmatmul.bf16.gmra.mxu0 %v432
        %v506 = vpop.f32.mrf.mxu0
        %v507 = vadd.f32 %v318, %v506
        %v508 = vpop.f32.mrf.mxu0
        %v509 = vadd.f32 %v318, %v508
        %510 = vmatmul.bf16.gmra.mxu0 %v435
        %v511 = vpop.f32.mrf.mxu0
        %v512 = vadd.f32 %v318, %v511
        %v513 = vpop.f32.mrf.mxu0
        %v514 = vadd.f32 %v318, %v513
        %515 = vmatmul.bf16.gmra.mxu0 %v438
        %v516 = vpop.f32.mrf.mxu0
        %v517 = vadd.f32 %v318, %v516
        %v518 = vpop.f32.mrf.mxu0
        %v519 = vadd.f32 %v318, %v518
        %520 = vmatmul.bf16.gmra.mxu0 %v441
        %v521 = vpop.f32.mrf.mxu0
        %v522 = vadd.f32 %v318, %v521
        %v523 = vpop.f32.mrf.mxu0
        %v524 = vadd.f32 %v318, %v523
        %525 = vmatmul.bf16.gmra.mxu0 %v444
        %v526 = vpop.f32.mrf.mxu0
        %v527 = vadd.f32 %v318, %v526
        %v528 = vpop.f32.mrf.mxu0
        %v529 = vadd.f32 %v318, %v528
        %530 = vmatmul.bf16.gmra.mxu0 %v447
        %v531 = vpop.f32.mrf.mxu0
        %v532 = vadd.f32 %v318, %v531
        %v533 = vpop.f32.mrf.mxu0
        %v534 = vadd.f32 %v318, %v533
        %535 = vmatmul.bf16.gmra.mxu0 %v450
        %v536 = vpop.f32.mrf.mxu0
        %v537 = vadd.f32 %v318, %v536
        %v538 = vpop.f32.mrf.mxu0
        %v539 = vadd.f32 %v318, %v538
        %540 = vmatmul.bf16.gmra.mxu0 %v453
        %v541 = vpop.f32.mrf.mxu0
        %v542 = vadd.f32 %v318, %v541
        %v543 = vpop.f32.mrf.mxu0
        %v544 = vadd.f32 %v318, %v543
        %545 = vmatmul.bf16.gmra.mxu0 %v456
        %v546 = vpop.f32.mrf.mxu0
        %v547 = vadd.f32 %v318, %v546
        %v548 = vpop.f32.mrf.mxu0
        %v549 = vadd.f32 %v318, %v548
        %550 = vdwg.mxu0
        %v551 = vmax.f32 %v472, 0.0
        %v552 = vmax.f32 %v474, 0.0
        %v553 = vmax.f32 %v477, 0.0
        %v554 = vmax.f32 %v479, 0.0
        %v555 = vmax.f32 %v482, 0.0
        %v556 = vmax.f32 %v484, 0.0
        %v557 = vmax.f32 %v487, 0.0
        %v558 = vmax.f32 %v489, 0.0
        %v559 = vmax.f32 %v492, 0.0
        %v560 = vmax.f32 %v494, 0.0
        %v561 = vmax.f32 %v497, 0.0
        %v562 = vmax.f32 %v499, 0.0
        %v563 = vmax.f32 %v502, 0.0
        %v564 = vmax.f32 %v504, 0.0
        %v565 = vmax.f32 %v507, 0.0
        %v566 = vmax.f32 %v509, 0.0
        %v567 = vmax.f32 %v512, 0.0
        %v568 = vmax.f32 %v514, 0.0
        %v569 = vmax.f32 %v517, 0.0
        %v570 = vmax.f32 %v519, 0.0
        %v571 = vmax.f32 %v522, 0.0
        %v572 = vmax.f32 %v524, 0.0
        %v573 = vmax.f32 %v527, 0.0
        %v574 = vmax.f32 %v529, 0.0
        %v575 = vmax.f32 %v532, 0.0
        %v576 = vmax.f32 %v534, 0.0
        %v577 = vmax.f32 %v537, 0.0
        %v578 = vmax.f32 %v539, 0.0
        %v579 = vmax.f32 %v542, 0.0
        %v580 = vmax.f32 %v544, 0.0
        %v581 = vmax.f32 %v547, 0.0
        %v582 = vmax.f32 %v549, 0.0
        %v583 = vpack.c.bf16 %v552, %v551
        %v584 = vpack.c.bf16 %v554, %v553
        %v585 = vpack.c.bf16 %v556, %v555
        %v586 = vpack.c.bf16 %v558, %v557
        %v587 = vpack.c.bf16 %v560, %v559
        %v588 = vpack.c.bf16 %v562, %v561
        %v589 = vpack.c.bf16 %v564, %v563
        %v590 = vpack.c.bf16 %v566, %v565
        %v591 = vpack.c.bf16 %v568, %v567
        %v592 = vpack.c.bf16 %v570, %v569
        %v593 = vpack.c.bf16 %v572, %v571
        %v594 = vpack.c.bf16 %v574, %v573
        %v595 = vpack.c.bf16 %v576, %v575
        %v596 = vpack.c.bf16 %v578, %v577
        %v597 = vpack.c.bf16 %v580, %v579
        %v598 = vpack.c.bf16 %v582, %v581
        %v599 = vld [vmem:[%s3] sm:$0xf]
        %v600 = vld [vmem:[%s3 + $0x4] sm:$0xf]
        %v601 = vld [vmem:[%s3 + $0x8] sm:$0xf]
        %v602 = vld [vmem:[%s3 + $0xc] sm:$0xf]
        %v603 = vld [vmem:[%s3 + $0x10] sm:$0xf]
        %v604 = vld [vmem:[%s3 + $0x14] sm:$0xf]
        %v605 = vld [vmem:[%s3 + $0x18] sm:$0xf]
        %v606 = vld [vmem:[%s3 + $0x1c] sm:$0xf]
        %v607 = vld [vmem:[%s3 + $0x20] sm:$0xf]
        %v608 = vld [vmem:[%s3 + $0x24] sm:$0xf]
        %v609 = vld [vmem:[%s3 + $0x28] sm:$0xf]
        %v610 = vld [vmem:[%s3 + $0x2c] sm:$0xf]
        %v611 = vld [vmem:[%s3 + $0x30] sm:$0xf]
        %v612 = vld [vmem:[%s3 + $0x34] sm:$0xf]
        %v613 = vld [vmem:[%s3 + $0x38] sm:$0xf]
        %v614 = vld [vmem:[%s3 + $0x3c] sm:$0xf]
        %v615 = vld [vmem:[%s4] sm:$0x1]
        %v617 = vperm.slane %v615, 0
        %v635 = vunpack.c.l.b16 %v599
        %v636 = vunpack.c.l.b16 %v600
        %v637 = vunpack.c.l.b16 %v601
        %v638 = vunpack.c.l.b16 %v602
        %v639 = vunpack.c.l.b16 %v603
        %v640 = vunpack.c.l.b16 %v604
        %v641 = vunpack.c.l.b16 %v605
        %v642 = vunpack.c.l.b16 %v606
        %v643 = vunpack.c.l.b16 %v607
        %v644 = vunpack.c.l.b16 %v608
        %v645 = vunpack.c.l.b16 %v609
        %v646 = vunpack.c.l.b16 %v610
        %v647 = vunpack.c.l.b16 %v611
        %v648 = vunpack.c.l.b16 %v612
        %v649 = vunpack.c.l.b16 %v613
        %v650 = vunpack.c.l.b16 %v614
        %v651 = vpack.c.b16 %v636, %v635
        %v652 = vpack.c.b16 %v638, %v637
        %v653 = vpack.c.b16 %v640, %v639
        %v654 = vpack.c.b16 %v642, %v641
        %v655 = vpack.c.b16 %v644, %v643
        %v656 = vpack.c.b16 %v646, %v645
        %v657 = vpack.c.b16 %v648, %v647
        %v658 = vpack.c.b16 %v650, %v649
        %667 = vmatpush.bf16.msra.mxu0 %v658
        %668 = vmatpush.bf16.msra.mxu0 %v657
        %669 = vmatpush.bf16.msra.mxu0 %v656
        %670 = vmatpush.bf16.msra.mxu0 %v655
        %671 = vmatpush.bf16.msra.mxu0 %v654
        %672 = vmatpush.bf16.msra.mxu0 %v653
        %673 = vmatpush.bf16.msra.mxu0 %v652
        %674 = vmatpush.bf16.msra.mxu0 %v651
        %675 = vmatmul.bf16.gmra.mxu0 %v583
        %v676 = vpop.f32.mrf.mxu0
        %v677 = vadd.f32 %v617, %v676
        %v678 = vpop.f32.mrf.mxu0
        %v679 = vadd.f32 %v617, %v678
        %680 = vmatmul.bf16.gmra.mxu0 %v584
        %v681 = vpop.f32.mrf.mxu0
        %v682 = vadd.f32 %v617, %v681
        %v683 = vpop.f32.mrf.mxu0
        %v684 = vadd.f32 %v617, %v683
        %685 = vmatmul.bf16.gmra.mxu0 %v585
        %v686 = vpop.f32.mrf.mxu0
        %v687 = vadd.f32 %v617, %v686
        %v688 = vpop.f32.mrf.mxu0
        %v689 = vadd.f32 %v617, %v688
        %690 = vmatmul.bf16.gmra.mxu0 %v586
        %v691 = vpop.f32.mrf.mxu0
        %v692 = vadd.f32 %v617, %v691
        %v693 = vpop.f32.mrf.mxu0
        %v694 = vadd.f32 %v617, %v693
        %695 = vmatmul.bf16.gmra.mxu0 %v587
        %v696 = vpop.f32.mrf.mxu0
        %v697 = vadd.f32 %v617, %v696
        %v698 = vpop.f32.mrf.mxu0
        %v699 = vadd.f32 %v617, %v698
        %700 = vmatmul.bf16.gmra.mxu0 %v588
        %v701 = vpop.f32.mrf.mxu0
        %v702 = vadd.f32 %v617, %v701
        %v703 = vpop.f32.mrf.mxu0
        %v704 = vadd.f32 %v617, %v703
        %705 = vmatmul.bf16.gmra.mxu0 %v589
        %v706 = vpop.f32.mrf.mxu0
        %v707 = vadd.f32 %v617, %v706
        %v708 = vpop.f32.mrf.mxu0
        %v709 = vadd.f32 %v617, %v708
        %710 = vmatmul.bf16.gmra.mxu0 %v590
        %v711 = vpop.f32.mrf.mxu0
        %v712 = vadd.f32 %v617, %v711
        %v713 = vpop.f32.mrf.mxu0
        %v714 = vadd.f32 %v617, %v713
        %715 = vmatmul.bf16.gmra.mxu0 %v591
        %v716 = vpop.f32.mrf.mxu0
        %v717 = vadd.f32 %v617, %v716
        %v718 = vpop.f32.mrf.mxu0
        %v719 = vadd.f32 %v617, %v718
        %720 = vmatmul.bf16.gmra.mxu0 %v592
        %v721 = vpop.f32.mrf.mxu0
        %v722 = vadd.f32 %v617, %v721
        %v723 = vpop.f32.mrf.mxu0
        %v724 = vadd.f32 %v617, %v723
        %725 = vmatmul.bf16.gmra.mxu0 %v593
        %v726 = vpop.f32.mrf.mxu0
        %v727 = vadd.f32 %v617, %v726
        %v728 = vpop.f32.mrf.mxu0
        %v729 = vadd.f32 %v617, %v728
        %730 = vmatmul.bf16.gmra.mxu0 %v594
        %v731 = vpop.f32.mrf.mxu0
        %v732 = vadd.f32 %v617, %v731
        %v733 = vpop.f32.mrf.mxu0
        %v734 = vadd.f32 %v617, %v733
        %735 = vmatmul.bf16.gmra.mxu0 %v595
        %v736 = vpop.f32.mrf.mxu0
        %v737 = vadd.f32 %v617, %v736
        %v738 = vpop.f32.mrf.mxu0
        %v739 = vadd.f32 %v617, %v738
        %740 = vmatmul.bf16.gmra.mxu0 %v596
        %v741 = vpop.f32.mrf.mxu0
        %v742 = vadd.f32 %v617, %v741
        %v743 = vpop.f32.mrf.mxu0
        %v744 = vadd.f32 %v617, %v743
        %745 = vmatmul.bf16.gmra.mxu0 %v597
        %v746 = vpop.f32.mrf.mxu0
        %v747 = vadd.f32 %v617, %v746
        %v748 = vpop.f32.mrf.mxu0
        %v749 = vadd.f32 %v617, %v748
        %750 = vmatmul.bf16.gmra.mxu0 %v598
        %v751 = vpop.f32.mrf.mxu0
        %v752 = vadd.f32 %v617, %v751
        %v753 = vpop.f32.mrf.mxu0
        %v754 = vadd.f32 %v617, %v753
        %755 = vdwg.mxu0
        %v756 = vmax.f32 %v677, 0.0
        %v757 = vmax.f32 %v679, 0.0
        %v758 = vmax.f32 %v682, 0.0
        %v759 = vmax.f32 %v684, 0.0
        %v760 = vmax.f32 %v687, 0.0
        %v761 = vmax.f32 %v689, 0.0
        %v762 = vmax.f32 %v692, 0.0
        %v763 = vmax.f32 %v694, 0.0
        %v764 = vmax.f32 %v697, 0.0
        %v765 = vmax.f32 %v699, 0.0
        %v766 = vmax.f32 %v702, 0.0
        %v767 = vmax.f32 %v704, 0.0
        %v768 = vmax.f32 %v707, 0.0
        %v769 = vmax.f32 %v709, 0.0
        %v770 = vmax.f32 %v712, 0.0
        %v771 = vmax.f32 %v714, 0.0
        %v772 = vmax.f32 %v717, 0.0
        %v773 = vmax.f32 %v719, 0.0
        %v774 = vmax.f32 %v722, 0.0
        %v775 = vmax.f32 %v724, 0.0
        %v776 = vmax.f32 %v727, 0.0
        %v777 = vmax.f32 %v729, 0.0
        %v778 = vmax.f32 %v732, 0.0
        %v779 = vmax.f32 %v734, 0.0
        %v780 = vmax.f32 %v737, 0.0
        %v781 = vmax.f32 %v739, 0.0
        %v782 = vmax.f32 %v742, 0.0
        %v783 = vmax.f32 %v744, 0.0
        %v784 = vmax.f32 %v747, 0.0
        %v785 = vmax.f32 %v749, 0.0
        %v786 = vmax.f32 %v752, 0.0
        %v787 = vmax.f32 %v754, 0.0
        %v788 = vpack.c.bf16 %v757, %v756
        %v789 = vpack.c.bf16 %v759, %v758
        %v790 = vpack.c.bf16 %v761, %v760
        %v791 = vpack.c.bf16 %v763, %v762
        %v792 = vpack.c.bf16 %v765, %v764
        %v793 = vpack.c.bf16 %v767, %v766
        %v794 = vpack.c.bf16 %v769, %v768
        %v795 = vpack.c.bf16 %v771, %v770
        %v796 = vpack.c.bf16 %v773, %v772
        %v797 = vpack.c.bf16 %v775, %v774
        %v798 = vpack.c.bf16 %v777, %v776
        %v799 = vpack.c.bf16 %v779, %v778
        %v800 = vpack.c.bf16 %v781, %v780
        %v801 = vpack.c.bf16 %v783, %v782
        %v802 = vpack.c.bf16 %v785, %v784
        %v803 = vpack.c.bf16 %v787, %v786
        %v804 = vld [vmem:[%s5] sm:$0xf]
        %v805 = vld [vmem:[%s5 + $0x4] sm:$0xf]
        %v806 = vld [vmem:[%s5 + $0x8] sm:$0xf]
        %v807 = vld [vmem:[%s5 + $0xc] sm:$0xf]
        %v808 = vld [vmem:[%s5 + $0x10] sm:$0xf]
        %v809 = vld [vmem:[%s5 + $0x14] sm:$0xf]
        %v810 = vld [vmem:[%s5 + $0x18] sm:$0xf]
        %v811 = vld [vmem:[%s5 + $0x1c] sm:$0xf]
        %v812 = vld [vmem:[%s5 + $0x20] sm:$0xf]
        %v813 = vld [vmem:[%s5 + $0x24] sm:$0xf]
        %v814 = vld [vmem:[%s5 + $0x28] sm:$0xf]
        %v815 = vld [vmem:[%s5 + $0x2c] sm:$0xf]
        %v816 = vld [vmem:[%s5 + $0x30] sm:$0xf]
        %v817 = vld [vmem:[%s5 + $0x34] sm:$0xf]
        %v818 = vld [vmem:[%s5 + $0x38] sm:$0xf]
        %v819 = vld [vmem:[%s5 + $0x3c] sm:$0xf]
        %v820 = vld [vmem:[%s6] sm:$0x1]
        %v822 = vperm.slane %v820, 0
        %v840 = vunpack.c.l.b16 %v804
        %v841 = vunpack.c.l.b16 %v805
        %v842 = vunpack.c.l.b16 %v806
        %v843 = vunpack.c.l.b16 %v807
        %v844 = vunpack.c.l.b16 %v808
        %v845 = vunpack.c.l.b16 %v809
        %v846 = vunpack.c.l.b16 %v810
        %v847 = vunpack.c.l.b16 %v811
        %v848 = vunpack.c.l.b16 %v812
        %v849 = vunpack.c.l.b16 %v813
        %v850 = vunpack.c.l.b16 %v814
        %v851 = vunpack.c.l.b16 %v815
        %v852 = vunpack.c.l.b16 %v816
        %v853 = vunpack.c.l.b16 %v817
        %v854 = vunpack.c.l.b16 %v818
        %v855 = vunpack.c.l.b16 %v819
        %v856 = vpack.c.b16 %v841, %v840
        %v857 = vpack.c.b16 %v843, %v842
        %v858 = vpack.c.b16 %v845, %v844
        %v859 = vpack.c.b16 %v847, %v846
        %v860 = vpack.c.b16 %v849, %v848
        %v861 = vpack.c.b16 %v851, %v850
        %v862 = vpack.c.b16 %v853, %v852
        %v863 = vpack.c.b16 %v855, %v854
        %872 = vmatpush.bf16.msra.mxu0 %v863
        %873 = vmatpush.bf16.msra.mxu0 %v862
        %874 = vmatpush.bf16.msra.mxu0 %v861
        %875 = vmatpush.bf16.msra.mxu0 %v860
        %876 = vmatpush.bf16.msra.mxu0 %v859
        %877 = vmatpush.bf16.msra.mxu0 %v858
        %878 = vmatpush.bf16.msra.mxu0 %v857
        %879 = vmatpush.bf16.msra.mxu0 %v856
        %880 = vmatmul.bf16.gmra.mxu0 %v788
        %v881 = vpop.f32.mrf.mxu0
        %v882 = vadd.f32 %v822, %v881
        %v883 = vpop.f32.mrf.mxu0
        %v884 = vadd.f32 %v822, %v883
        %885 = vmatmul.bf16.gmra.mxu0 %v789
        %v886 = vpop.f32.mrf.mxu0
        %v887 = vadd.f32 %v822, %v886
        %v888 = vpop.f32.mrf.mxu0
        %v889 = vadd.f32 %v822, %v888
        %890 = vmatmul.bf16.gmra.mxu0 %v790
        %v891 = vpop.f32.mrf.mxu0
        %v892 = vadd.f32 %v822, %v891
        %v893 = vpop.f32.mrf.mxu0
        %v894 = vadd.f32 %v822, %v893
        %895 = vmatmul.bf16.gmra.mxu0 %v791
        %v896 = vpop.f32.mrf.mxu0
        %v897 = vadd.f32 %v822, %v896
        %v898 = vpop.f32.mrf.mxu0
        %v899 = vadd.f32 %v822, %v898
        %900 = vmatmul.bf16.gmra.mxu0 %v792
        %v901 = vpop.f32.mrf.mxu0
        %v902 = vadd.f32 %v822, %v901
        %v903 = vpop.f32.mrf.mxu0
        %v904 = vadd.f32 %v822, %v903
        %905 = vmatmul.bf16.gmra.mxu0 %v793
        %v906 = vpop.f32.mrf.mxu0
        %v907 = vadd.f32 %v822, %v906
        %v908 = vpop.f32.mrf.mxu0
        %v909 = vadd.f32 %v822, %v908
        %910 = vmatmul.bf16.gmra.mxu0 %v794
        %v911 = vpop.f32.mrf.mxu0
        %v912 = vadd.f32 %v822, %v911
        %v913 = vpop.f32.mrf.mxu0
        %v914 = vadd.f32 %v822, %v913
        %915 = vmatmul.bf16.gmra.mxu0 %v795
        %v916 = vpop.f32.mrf.mxu0
        %v917 = vadd.f32 %v822, %v916
        %v918 = vpop.f32.mrf.mxu0
        %v919 = vadd.f32 %v822, %v918
        %920 = vmatmul.bf16.gmra.mxu0 %v796
        %v921 = vpop.f32.mrf.mxu0
        %v922 = vadd.f32 %v822, %v921
        %v923 = vpop.f32.mrf.mxu0
        %v924 = vadd.f32 %v822, %v923
        %925 = vmatmul.bf16.gmra.mxu0 %v797
        %v926 = vpop.f32.mrf.mxu0
        %v927 = vadd.f32 %v822, %v926
        %v928 = vpop.f32.mrf.mxu0
        %v929 = vadd.f32 %v822, %v928
        %930 = vmatmul.bf16.gmra.mxu0 %v798
        %v931 = vpop.f32.mrf.mxu0
        %v932 = vadd.f32 %v822, %v931
        %v933 = vpop.f32.mrf.mxu0
        %v934 = vadd.f32 %v822, %v933
        %935 = vmatmul.bf16.gmra.mxu0 %v799
        %v936 = vpop.f32.mrf.mxu0
        %v937 = vadd.f32 %v822, %v936
        %v938 = vpop.f32.mrf.mxu0
        %v939 = vadd.f32 %v822, %v938
        %940 = vmatmul.bf16.gmra.mxu0 %v800
        %v941 = vpop.f32.mrf.mxu0
        %v942 = vadd.f32 %v822, %v941
        %v943 = vpop.f32.mrf.mxu0
        %v944 = vadd.f32 %v822, %v943
        %945 = vmatmul.bf16.gmra.mxu0 %v801
        %v946 = vpop.f32.mrf.mxu0
        %v947 = vadd.f32 %v822, %v946
        %v948 = vpop.f32.mrf.mxu0
        %v949 = vadd.f32 %v822, %v948
        %950 = vmatmul.bf16.gmra.mxu0 %v802
        %v951 = vpop.f32.mrf.mxu0
        %v952 = vadd.f32 %v822, %v951
        %v953 = vpop.f32.mrf.mxu0
        %v954 = vadd.f32 %v822, %v953
        %955 = vmatmul.bf16.gmra.mxu0 %v803
        %v956 = vpop.f32.mrf.mxu0
        %v957 = vadd.f32 %v822, %v956
        %v958 = vpop.f32.mrf.mxu0
        %v959 = vadd.f32 %v822, %v958
        %960 = vdwg.mxu0
        %961 = vst [vmem:[%s272] sm:$0xff] %v882
        %962 = vst [vmem:[%s272 + $0x8] sm:$0xff] %v884
        %963 = vst [vmem:[%s272 + $0x10] sm:$0xff] %v887
        %964 = vst [vmem:[%s272 + $0x18] sm:$0xff] %v889
        %965 = vst [vmem:[%s272 + $0x20] sm:$0xff] %v892
        %966 = vst [vmem:[%s272 + $0x28] sm:$0xff] %v894
        %967 = vst [vmem:[%s272 + $0x30] sm:$0xff] %v897
        %968 = vst [vmem:[%s272 + $0x38] sm:$0xff] %v899
        %969 = vst [vmem:[%s272 + $0x40] sm:$0xff] %v902
        %970 = vst [vmem:[%s272 + $0x48] sm:$0xff] %v904
        %971 = vst [vmem:[%s272 + $0x50] sm:$0xff] %v907
        %972 = vst [vmem:[%s272 + $0x58] sm:$0xff] %v909
        %973 = vst [vmem:[%s272 + $0x60] sm:$0xff] %v912
        %974 = vst [vmem:[%s272 + $0x68] sm:$0xff] %v914
        %975 = vst [vmem:[%s272 + $0x70] sm:$0xff] %v917
        %976 = vst [vmem:[%s272 + $0x78] sm:$0xff] %v919
        %977 = vst [vmem:[%s272 + $0x80] sm:$0xff] %v922
        %978 = vst [vmem:[%s272 + $0x88] sm:$0xff] %v924
        %979 = vst [vmem:[%s272 + $0x90] sm:$0xff] %v927
        %980 = vst [vmem:[%s272 + $0x98] sm:$0xff] %v929
        %981 = vst [vmem:[%s272 + $0xa0] sm:$0xff] %v932
        %982 = vst [vmem:[%s272 + $0xa8] sm:$0xff] %v934
        %983 = vst [vmem:[%s272 + $0xb0] sm:$0xff] %v937
        %984 = vst [vmem:[%s272 + $0xb8] sm:$0xff] %v939
        %985 = vst [vmem:[%s272 + $0xc0] sm:$0xff] %v942
        %986 = vst [vmem:[%s272 + $0xc8] sm:$0xff] %v944
        %987 = vst [vmem:[%s272 + $0xd0] sm:$0xff] %v947
        %988 = vst [vmem:[%s272 + $0xd8] sm:$0xff] %v949
        %989 = vst [vmem:[%s272 + $0xe0] sm:$0xff] %v952
        %990 = vst [vmem:[%s272 + $0xe8] sm:$0xff] %v954
        %991 = vst [vmem:[%s272 + $0xf0] sm:$0xff] %v957
        %992 = vst [vmem:[%s272 + $0xf8] sm:$0xff] %v959
        %s993 = sand.u32 %s181, 1
        %s994 = scalar_lea.sflag [#allocation3], %s993
        %s995 = sand.u32 %s181, 1
        %s996 = smul.addr %s995, 256
        %s997 = scalar_lea.vmem [#allocation2], %s996
        // Predicated region
        $region49: #{tpu_custom_call.1} parent=47 // pred_check
          %p998 = pneg %p191
        $region50: #{tpu_custom_call.1} parent=47 // pred_check_branch
          %1000 = sbr.rel (%p998) target = $region52
        $region51: #{tpu_custom_call.1} parent=47 // pred_region
          %s1001 = smul.u32 32, %s21
          %1003 = vsyncadd %s994, 0
          %s1004 = smul.addr %s1001, 8
          %s1005 = scalar_lea.hbm %s7, %s1004
          %s1006 = sshll.u32 %s997, 4
          %s1007 = int_to_ptr.vmem [resolvable:$true] %s1006
          %s1008 = sshll.u32 %s1005, 4
          %s1009 = int_to_ptr.hbm [resolvable:$true] %s1008
          %1014 = dma.vmem_to_hbm [thread:$0]  %s1007, 4096, %s1009, %s994, 128, 128, 8
        $region52: #{tpu_custom_call.1} parent=47 // pred_fallthru
          _
      $region48: #{tpu_custom_call.1} parent=5 // pred_fallthru
        _
      %p1015 = scmp.le.s32.totalorder 2, %s16
      // Predicated region
      $region53: #{tpu_custom_call.1} parent=5 // pred_check
        %p1016 = pneg %p1015
      $region54: #{tpu_custom_call.1} parent=5 // pred_check_branch
        %1018 = sbr.rel (%p1016) target = $region56
      $region55: #{tpu_custom_call.1} parent=5 // pred_region
        %s1019 = ssub.s32 %s16, 2
        // Predicated region
        $region57: #{tpu_custom_call.1} parent=55 // pred_check
          %p1020 = pneg %p197
        $region58: #{tpu_custom_call.1} parent=55 // pred_check_branch
          %1022 = sbr.rel (%p1020) target = $region60
        $region59: #{tpu_custom_call.1} parent=55 // pred_region
          %s1023 = sand.u32 %s182, 1
          %s1024 = scalar_lea.sflag [#allocation3], %s1023
          %s1025 = sand.u32 %s182, 1
          %s1026 = smul.addr %s1025, 256
          %s1027 = scalar_lea.vmem [#allocation2], %s1026
          %1029 = dma.done %s1024, 4096
        $region60: #{tpu_custom_call.1} parent=55 // pred_fallthru
          _
      $region56: #{tpu_custom_call.1} parent=5 // pred_fallthru
        _
    $region6: #{tpu_custom_call.1} parent=1 // loop_footer
      %s20 = sadd.s32 1, %s16
    $region7: #{tpu_custom_call.1} parent=1 // loop_footer_branch
      %15 = sbr.rel target = $region3
    $region8: #{tpu_custom_call.1} parent=1 // loop_exit
      _
    %1030 = vsyncpa [#allocation3], 1
    %s1031 = scalar_lea.sflag [#allocation3], 1
    %1032 = vsyncpa %s1031, 1

</llo_original>
